<compile_context>
chip_gen: v6e
topology: v6e:2x2x1
jax: 0.10.0
libtpu: 0.0.40
codegen_flags: <defaults>
</compile_context>

<pallas_src>
import numpy as np

import jax
import jax.numpy as jnp
from jax.experimental import pallas as pl
from jax.experimental.pallas import tpu as pltpu


# ----------------------------------------------------------------------------
# Kernel: one graph per grid step.
# ----------------------------------------------------------------------------
def _gcn_graph_kernel(
    a_ref,        # (1, n_pad, n_pad)  normalized adjacency block (this graph)
    x_ref,        # (1, n_pad, F)      node features (zero padded)
    w0_ref,       # (F, E)             in_conv weight
    wstack_ref,   # (4, E, E)          conv1..conv4 weights
    bstack_ref,   # (5, E)             biases for in_conv, conv1..conv4
    mask_ref,     # (1, n_pad, 2)      col0: 0/1 membership, col1: 1/count
    wout_ref,     # (2, E)             final linear weight split (max | mean)
    bout_ref,     # (1,)  SMEM         final linear bias
    out_ref,      # (1, 1, 1)          output
    hidden_ref,   # (1, 1, 2E)         pooled hidden (max || mean)
):
    emb = wstack_ref.shape[-1]

    a = a_ref[0].astype(jnp.bfloat16)          # (n_pad, n_pad)

    # ---- GCN layer 0: tanh(A @ (x @ W0) + b0); bf16 MXU in, f32 accumulate.
    xw = jnp.dot(x_ref[0].astype(jnp.bfloat16),
                 w0_ref[...].astype(jnp.bfloat16),
                 preferred_element_type=jnp.float32)
    h = jnp.tanh(
        jnp.dot(a, xw.astype(jnp.bfloat16), preferred_element_type=jnp.float32)
        + bstack_ref[0:1, :])

    # ---- GCN layers 1..4 (static unroll) ----
    for l in range(4):
        hw = jnp.dot(h.astype(jnp.bfloat16),
                     wstack_ref[l].astype(jnp.bfloat16),
                     preferred_element_type=jnp.float32)
        h = jnp.tanh(
            jnp.dot(a, hw.astype(jnp.bfloat16),
                    preferred_element_type=jnp.float32)
            + bstack_ref[l + 1:l + 2, :])

    m = mask_ref[0]                              # (n_pad, 2)
    valid = m[:, 0:1]                            # (n_pad, 1), exact 0.0 / 1.0
    meanw = m[:, 1:2]                            # (n_pad, 1), 1/count or 0

    # ---- per-graph pooling: sublane reductions only, no (B, N, E) broadcast.
    gmax = jnp.max(jnp.where(valid > 0.5, h, -1e30), axis=0, keepdims=True)  # (1,E)
    gmean = jnp.sum(h * meanw, axis=0, keepdims=True)                        # (1,E)

    # ---- hidden = [max || mean] written as two slices (no lane concatenate).
    hidden_ref[0, :, 0:emb] = gmax
    hidden_ref[0, :, emb:] = gmean

    # ---- final linear: VPU multiply + lane reduce against the split weights.
    s = jnp.sum(gmax * wout_ref[0:1, :] + gmean * wout_ref[1:2, :],
                axis=-1, keepdims=True)                                      # (1,1)
    out_ref[0] = s + bout_ref[0]


# ----------------------------------------------------------------------------
# Wrapper
# ----------------------------------------------------------------------------
def _tile_bytes(shape, itemsize=4):
    """VMEM footprint of one block, accounting for (8,128) tile padding."""
    dims = list(shape)
    dims[-1] = -(-dims[-1] // 128) * 128
    if len(dims) >= 2:
        dims[-2] = -(-dims[-2] // 8) * 8
    n = 1
    for d in dims:
        n *= int(d)
    return n * itemsize


def gcn_forward(a_blocks, x_blocks, masks, packed):
    """a_blocks: (B, n_pad, n_pad); x_blocks: (B, n_pad, F);
    masks: (B, n_pad, 2) with [.,.,0]=membership, [.,.,1]=1/count;
    packed: dict with w0 (F,E), w_stack (4,E,E), b_stack (5,E),
    w_out_split (2,E), b_out (1,)."""
    b_graphs, n_pad, _ = a_blocks.shape
    feat = x_blocks.shape[-1]
    emb = packed["w_stack"].shape[-1]

    in_specs = [
        pl.BlockSpec((1, n_pad, n_pad), lambda g: (g, 0, 0)),   # a block
        pl.BlockSpec((1, n_pad, feat), lambda g: (g, 0, 0)),    # x block
        pl.BlockSpec((feat, emb), lambda g: (0, 0)),            # w0 (resident)
        pl.BlockSpec((4, emb, emb), lambda g: (0, 0, 0)),       # w1..w4
        pl.BlockSpec((5, emb), lambda g: (0, 0)),               # biases
        pl.BlockSpec((1, n_pad, 2), lambda g: (g, 0, 0)),       # masks
        pl.BlockSpec((2, emb), lambda g: (0, 0)),               # w_out split
        pl.BlockSpec(memory_space=pltpu.MemorySpace.SMEM),      # b_out scalar
    ]
    out_specs = (
        pl.BlockSpec((1, 1, 1), lambda g: (g, 0, 0)),
        pl.BlockSpec((1, 1, 2 * emb), lambda g: (g, 0, 0)),
    )

    # Cost estimate for XLA scheduling around the custom call.
    flops = int(b_graphs * (2 * n_pad * feat * emb
                            + 5 * 2 * n_pad * n_pad * emb
                            + 4 * 2 * n_pad * emb * emb
                            + 4 * n_pad * emb + 4 * emb))
    transcendentals = int(5 * b_graphs * n_pad * emb)
    in_arrays = (a_blocks, x_blocks, packed["w0"], packed["w_stack"],
                 packed["b_stack"], masks, packed["w_out_split"],
                 packed["b_out"])
    bytes_accessed = int(4 * (sum(int(a.size) for a in in_arrays)
                              + b_graphs * (1 + 2 * emb)))

    # Per-step VMEM estimate: tile-padded block sizes, 2x for double-buffering.
    step_blocks = [(1, n_pad, n_pad), (1, n_pad, feat), (feat, emb),
                   (4, emb, emb), (5, emb), (1, n_pad, 2), (2, emb),
                   (1, 1, 1), (1, 1, 2 * emb)]
    vmem_est = 2 * sum(_tile_bytes(s) for s in step_blocks)

    cp_kwargs = dict(dimension_semantics=("parallel",))
    # v5e default scoped limit is 16 MiB -> raise early; cap at ~85% physical
    # (decisive on v7x's 64 MiB VMEM).
    if vmem_est > (12 << 20):
        try:
            phys = int(pltpu.get_tpu_info().vmem_capacity_bytes)
        except Exception:
            phys = 64 << 20
        cp_kwargs["vmem_limit_bytes"] = min(max(2 * vmem_est, 32 << 20),
                                            int(0.85 * phys))

    out3, hidden3 = pl.pallas_call(
        _gcn_graph_kernel,
        grid=(b_graphs,),
        in_specs=in_specs,
        out_specs=out_specs,
        out_shape=(
            jax.ShapeDtypeStruct((b_graphs, 1, 1), jnp.float32),
            jax.ShapeDtypeStruct((b_graphs, 1, 2 * emb), jnp.float32),
        ),
        compiler_params=pltpu.CompilerParams(**cp_kwargs),
        cost_estimate=pl.CostEstimate(flops=flops,
                                      transcendentals=transcendentals,
                                      bytes_accessed=bytes_accessed),
    )(a_blocks, x_blocks, packed["w0"], packed["w_stack"], packed["b_stack"],
      masks, packed["w_out_split"], packed["b_out"])

    return out3.reshape(b_graphs, 1), hidden3.reshape(b_graphs, 2 * emb)


# ----------------------------------------------------------------------------
# Glue: PyG-style normalization and block-diagonal packing.
# ----------------------------------------------------------------------------
def build_normalized_adjacency(edge_index, num_nodes):
    """Dense PyG gcn_norm: D^-1/2 (A + I) D^-1/2 (remaining self loops only)."""
    src, dst = edge_index
    a = jnp.zeros((num_nodes, num_nodes), jnp.float32)
    a = a.at[dst, src].set(1.0)
    a = jnp.maximum(a, jnp.eye(num_nodes, dtype=jnp.float32))
    deg = jnp.sum(a, axis=1)
    dinv = jnp.where(deg > 0, deg ** -0.5, 0.0)
    return dinv[:, None] * a * dinv[None, :]


def build_graph_blocks(x, edge_index, batch_index, n_graphs):
    """Split the batched graph into padded per-graph blocks (host-side)."""
    x_np = np.asarray(x, np.float32)
    batch_np = np.asarray(batch_index)
    if batch_np.size > 1:
        assert np.all(np.diff(batch_np) >= 0), "batch_index must be sorted"
    counts = np.bincount(batch_np, minlength=n_graphs).astype(np.int64)
    offsets = np.concatenate([[0], np.cumsum(counts)[:-1]])
    n_pad = max(8, int(-(-int(counts.max()) // 8) * 8))   # sublane-align

    num_nodes, feat = x_np.shape
    a_hat = np.asarray(build_normalized_adjacency(edge_index, num_nodes),
                       np.float32)

    a_blocks = np.zeros((n_graphs, n_pad, n_pad), np.float32)
    x_blocks = np.zeros((n_graphs, n_pad, feat), np.float32)
    masks = np.zeros((n_graphs, n_pad, 2), np.float32)
    for g in range(n_graphs):
        o, c = int(offsets[g]), int(counts[g])
        a_blocks[g, :c, :c] = a_hat[o:o + c, o:o + c]
        x_blocks[g, :c, :] = x_np[o:o + c]
        masks[g, :c, 0] = 1.0
        masks[g, :c, 1] = 1.0 / max(c, 1)
    return (jnp.asarray(a_blocks), jnp.asarray(x_blocks), jnp.asarray(masks),
            jnp.asarray(a_hat))


def pack_params(params):
    emb = params["w1"].shape[0]
    return {
        "w0": params["w0"],
        "w_stack": jnp.stack(
            [params["w1"], params["w2"], params["w3"], params["w4"]], axis=0),
        "b_stack": jnp.concatenate(
            [params["b0"], params["b1"], params["b2"],
             params["b3"], params["b4"]], axis=0),
        "w_out_split": jnp.stack(
            [params["w_out"][:emb, 0], params["w_out"][emb:, 0]], axis=0),
        "b_out": params["b_out"].reshape(-1),           # (1,)
    }


# ----------------------------------------------------------------------------
# Pure-JAX references (f32 and bf16-matmul-matched)
# ----------------------------------------------------------------------------
def reference_forward(a_hat, x, params, mask_bn, count, bf16_matmul):
    if bf16_matmul:
        def mm(a, b):
            return jnp.dot(a.astype(jnp.bfloat16), b.astype(jnp.bfloat16),
                           preferred_element_type=jnp.float32)
    else:
        def mm(a, b):
            return jnp.dot(a, b, preferred_element_type=jnp.float32)

    h = x
    for wn, bn in (("w0", "b0"), ("w1", "b1"), ("w2", "b2"),
                   ("w3", "b3"), ("w4", "b4")):
        h = jnp.tanh(mm(a_hat, mm(h, params[wn])) + params[bn])
    gmean = (mask_bn @ h) / count
    gmax = jnp.max(
        jnp.where(mask_bn[:, :, None] > 0, h[None, :, :], -jnp.inf), axis=1)
    hidden = jnp.concatenate([gmax, gmean], axis=1)
    out = hidden @ params["w_out"] + params["b_out"]
    return out, hidden


if __name__ == "__main__":
    # Small shapes consistent with the module's forward.
    N_NODES = 16          # total nodes across the batch
    N_FEATURES = 8        # n_features
    EMB = 32              # embedding_size
    N_GRAPHS = 2          # batch of 2 molecules (8 nodes each)

    key = jax.random.PRNGKey(0)
    keys = jax.random.split(key, 16)

    def init_w(k, shape, fan_in):
        return jax.random.normal(k, shape, jnp.float32) / jnp.sqrt(fan_in)

    params = {
        "w0": init_w(keys[0], (N_FEATURES, EMB), N_FEATURES),
        "b0": jnp.zeros((1, EMB), jnp.float32),
        "w1": init_w(keys[1], (EMB, EMB), EMB),
        "b1": 0.01 * jnp.ones((1, EMB), jnp.float32),
        "w2": init_w(keys[2], (EMB, EMB), EMB),
        "b2": -0.01 * jnp.ones((1, EMB), jnp.float32),
        "w3": init_w(keys[3], (EMB, EMB), EMB),
        "b3": jnp.zeros((1, EMB), jnp.float32),
        "w4": init_w(keys[4], (EMB, EMB), EMB),
        "b4": jnp.zeros((1, EMB), jnp.float32),
        "w_out": init_w(keys[5], (2 * EMB, 1), 2 * EMB),
        "b_out": 0.1 * jnp.ones((1, 1), jnp.float32),
    }

    # Node features.
    x = jax.random.normal(keys[6], (N_NODES, N_FEATURES), jnp.float32)

    # batch_index: first 8 nodes -> graph 0, next 8 -> graph 1.
    batch_index = jnp.concatenate(
        [jnp.zeros((8,), jnp.int32), jnp.ones((8,), jnp.int32)])

    # Undirected edges within each graph: a chain per graph plus a couple extra.
    src_list, dst_list = [], []
    for g0 in (0, 8):
        for i in range(7):
            src_list += [g0 + i, g0 + i + 1]
            dst_list += [g0 + i + 1, g0 + i]
        src_list += [g0 + 0, g0 + 5, g0 + 2, g0 + 7]
        dst_list += [g0 + 5, g0 + 0, g0 + 7, g0 + 2]
    edge_index = jnp.array([src_list, dst_list], dtype=jnp.int32)

    # Block-diagonal packing (per-graph padded blocks) + packed params.
    a_blocks, x_blocks, masks, a_hat = build_graph_blocks(
        x, edge_index, batch_index, N_GRAPHS)
    packed = pack_params(params)

    out, hidden = gcn_forward(a_blocks, x_blocks, masks, packed)
    out = jax.block_until_ready(out)
    hidden = jax.block_until_ready(hidden)

    # References: global (un-blocked) math; bf16-matmul-matched + f32 sanity.
    mask_bn = (jnp.asarray(batch_index)[None, :] ==
               jnp.arange(N_GRAPHS)[:, None]).astype(jnp.float32)   # (B, N)
    count = jnp.sum(mask_bn, axis=1, keepdims=True)                 # (B, 1)

    ref_out_b, ref_hid_b = reference_forward(a_hat, x, params, mask_bn, count,
                                             bf16_matmul=True)
    ref_out_f, ref_hid_f = reference_forward(a_hat, x, params, mask_bn, count,
                                             bf16_matmul=False)

    assert out.shape == (N_GRAPHS, 1) and hidden.shape == (N_GRAPHS, 2 * EMB)
    # Tight check against the bf16-matmul reference (same arithmetic).
    assert jnp.allclose(hidden, ref_hid_b, rtol=2e-3, atol=2e-3)
    assert jnp.allclose(out, ref_out_b, rtol=2e-3, atol=2e-3)
    # Loose sanity check against the full-f32 reference.
    assert jnp.allclose(hidden, ref_hid_f, rtol=1e-1, atol=1e-1)
    assert jnp.allclose(out, ref_out_f, rtol=1e-1, atol=1e-1)

    print("KERNEL_OK")
</pallas_src>

<mosaic_0001>
module attributes {stable_mosaic.version = 11 : i64} {
  func.func @_gcn_graph_kernel(%arg0: i32, %arg1: memref<1x8x8xf32, #tpu.memory_space<vmem>>, %arg2: memref<1x8x8xf32, #tpu.memory_space<vmem>>, %arg3: memref<8x32xf32, #tpu.memory_space<vmem>>, %arg4: memref<4x32x32xf32, #tpu.memory_space<vmem>>, %arg5: memref<5x32xf32, #tpu.memory_space<vmem>>, %arg6: memref<1x8x2xf32, #tpu.memory_space<vmem>>, %arg7: memref<2x32xf32, #tpu.memory_space<vmem>>, %arg8: memref<1xf32, #tpu.memory_space<smem>>, %arg9: memref<1x1x1xf32, #tpu.memory_space<vmem>>, %arg10: memref<1x1x64xf32, #tpu.memory_space<vmem>>) attributes {dimension_semantics = [#tpu.dimension_semantics<parallel>], iteration_bounds = array<i64: 2>, scalar_prefetch = 0 : i64, scratch_operands = 0 : i64, tpu.core_type = #tpu.core_type<tc>, window_params = [{transform_indices = @transform_0, window_bounds = array<i64: 1, 8, 8>}, {transform_indices = @transform_1, window_bounds = array<i64: 1, 8, 8>}, {pipeline_mode = #tpu.pipeline_mode<synchronous>, transform_indices = @transform_2, window_bounds = array<i64: 8, 32>}, {pipeline_mode = #tpu.pipeline_mode<synchronous>, transform_indices = @transform_3, window_bounds = array<i64: 4, 32, 32>}, {pipeline_mode = #tpu.pipeline_mode<synchronous>, transform_indices = @transform_4, window_bounds = array<i64: 5, 32>}, {transform_indices = @transform_5, window_bounds = array<i64: 1, 8, 2>}, {pipeline_mode = #tpu.pipeline_mode<synchronous>, transform_indices = @transform_6, window_bounds = array<i64: 2, 32>}, {transform_indices = @transform_7, window_bounds = array<i64: 1>}, {transform_indices = @transform_8, window_bounds = array<i64: 1, 1, 1>}, {transform_indices = @transform_9, window_bounds = array<i64: 1, 1, 64>}]} {
    %c0 = arith.constant 0 : index
    %c0_0 = arith.constant 0 : index
    %c0_1 = arith.constant 0 : index
    %0 = vector.load %arg1[%c0, %c0_0, %c0_1] : memref<1x8x8xf32, #tpu.memory_space<vmem>>, vector<1x8x8xf32>
    %1 = vector.shape_cast %0 : vector<1x8x8xf32> to vector<8x8xf32>
    %2 = arith.truncf %1 : vector<8x8xf32> to vector<8x8xbf16>
    %c0_2 = arith.constant 0 : index
    %c0_3 = arith.constant 0 : index
    %c0_4 = arith.constant 0 : index
    %3 = vector.load %arg2[%c0_2, %c0_3, %c0_4] : memref<1x8x8xf32, #tpu.memory_space<vmem>>, vector<1x8x8xf32>
    %4 = vector.shape_cast %3 : vector<1x8x8xf32> to vector<8x8xf32>
    %5 = arith.truncf %4 : vector<8x8xf32> to vector<8x8xbf16>
    %c0_5 = arith.constant 0 : index
    %c0_6 = arith.constant 0 : index
    %6 = vector.load %arg3[%c0_5, %c0_6] : memref<8x32xf32, #tpu.memory_space<vmem>>, vector<8x32xf32>
    %7 = arith.truncf %6 : vector<8x32xf32> to vector<8x32xbf16>
    %cst = arith.constant dense<0.000000e+00> : vector<8x32xf32>
    %8 = tpu.matmul %5, %7, %cst {dimension_numbers = #tpu.dot_dimension_numbers<[1], [0], [0], [1], [0, 0, 1, 1], [], []>} : vector<8x8xbf16>, vector<8x32xbf16>, vector<8x32xf32> -> vector<8x32xf32>
    %9 = arith.truncf %8 : vector<8x32xf32> to vector<8x32xbf16>
    %cst_7 = arith.constant dense<0.000000e+00> : vector<8x32xf32>
    %10 = tpu.matmul %2, %9, %cst_7 {dimension_numbers = #tpu.dot_dimension_numbers<[1], [0], [0], [1], [0, 0, 1, 1], [], []>} : vector<8x8xbf16>, vector<8x32xbf16>, vector<8x32xf32> -> vector<8x32xf32>
    %c0_8 = arith.constant 0 : index
    %c0_9 = arith.constant 0 : index
    %11 = vector.load %arg5[%c0_8, %c0_9] : memref<5x32xf32, #tpu.memory_space<vmem>>, vector<1x32xf32>
    %12 = vector.broadcast %11 : vector<1x32xf32> to vector<8x32xf32>
    %13 = arith.addf %10, %12 : vector<8x32xf32>
    %14 = math.tanh %13 : vector<8x32xf32>
    %15 = arith.truncf %14 : vector<8x32xf32> to vector<8x32xbf16>
    %c0_10 = arith.constant 0 : index
    %c0_11 = arith.constant 0 : index
    %c0_12 = arith.constant 0 : index
    %16 = vector.load %arg4[%c0_10, %c0_11, %c0_12] : memref<4x32x32xf32, #tpu.memory_space<vmem>>, vector<1x32x32xf32>
    %17 = vector.shape_cast %16 : vector<1x32x32xf32> to vector<32x32xf32>
    %18 = arith.truncf %17 : vector<32x32xf32> to vector<32x32xbf16>
    %cst_13 = arith.constant dense<0.000000e+00> : vector<8x32xf32>
    %19 = tpu.matmul %15, %18, %cst_13 {dimension_numbers = #tpu.dot_dimension_numbers<[1], [0], [0], [1], [0, 0, 1, 1], [], []>} : vector<8x32xbf16>, vector<32x32xbf16>, vector<8x32xf32> -> vector<8x32xf32>
    %20 = arith.truncf %19 : vector<8x32xf32> to vector<8x32xbf16>
    %cst_14 = arith.constant dense<0.000000e+00> : vector<8x32xf32>
    %21 = tpu.matmul %2, %20, %cst_14 {dimension_numbers = #tpu.dot_dimension_numbers<[1], [0], [0], [1], [0, 0, 1, 1], [], []>} : vector<8x8xbf16>, vector<8x32xbf16>, vector<8x32xf32> -> vector<8x32xf32>
    %c1 = arith.constant 1 : index
    %c0_15 = arith.constant 0 : index
    %22 = vector.load %arg5[%c1, %c0_15] : memref<5x32xf32, #tpu.memory_space<vmem>>, vector<1x32xf32>
    %23 = vector.broadcast %22 : vector<1x32xf32> to vector<8x32xf32>
    %24 = arith.addf %21, %23 : vector<8x32xf32>
    %25 = math.tanh %24 : vector<8x32xf32>
    %26 = arith.truncf %25 : vector<8x32xf32> to vector<8x32xbf16>
    %c1_16 = arith.constant 1 : index
    %c0_17 = arith.constant 0 : index
    %c0_18 = arith.constant 0 : index
    %27 = vector.load %arg4[%c1_16, %c0_17, %c0_18] : memref<4x32x32xf32, #tpu.memory_space<vmem>>, vector<1x32x32xf32>
    %28 = vector.shape_cast %27 : vector<1x32x32xf32> to vector<32x32xf32>
    %29 = arith.truncf %28 : vector<32x32xf32> to vector<32x32xbf16>
    %cst_19 = arith.constant dense<0.000000e+00> : vector<8x32xf32>
    %30 = tpu.matmul %26, %29, %cst_19 {dimension_numbers = #tpu.dot_dimension_numbers<[1], [0], [0], [1], [0, 0, 1, 1], [], []>} : vector<8x32xbf16>, vector<32x32xbf16>, vector<8x32xf32> -> vector<8x32xf32>
    %31 = arith.truncf %30 : vector<8x32xf32> to vector<8x32xbf16>
    %cst_20 = arith.constant dense<0.000000e+00> : vector<8x32xf32>
    %32 = tpu.matmul %2, %31, %cst_20 {dimension_numbers = #tpu.dot_dimension_numbers<[1], [0], [0], [1], [0, 0, 1, 1], [], []>} : vector<8x8xbf16>, vector<8x32xbf16>, vector<8x32xf32> -> vector<8x32xf32>
    %c2 = arith.constant 2 : index
    %c0_21 = arith.constant 0 : index
    %33 = vector.load %arg5[%c2, %c0_21] : memref<5x32xf32, #tpu.memory_space<vmem>>, vector<1x32xf32>
    %34 = vector.broadcast %33 : vector<1x32xf32> to vector<8x32xf32>
    %35 = arith.addf %32, %34 : vector<8x32xf32>
    %36 = math.tanh %35 : vector<8x32xf32>
    %37 = arith.truncf %36 : vector<8x32xf32> to vector<8x32xbf16>
    %c2_22 = arith.constant 2 : index
    %c0_23 = arith.constant 0 : index
    %c0_24 = arith.constant 0 : index
    %38 = vector.load %arg4[%c2_22, %c0_23, %c0_24] : memref<4x32x32xf32, #tpu.memory_space<vmem>>, vector<1x32x32xf32>
    %39 = vector.shape_cast %38 : vector<1x32x32xf32> to vector<32x32xf32>
    %40 = arith.truncf %39 : vector<32x32xf32> to vector<32x32xbf16>
    %cst_25 = arith.constant dense<0.000000e+00> : vector<8x32xf32>
    %41 = tpu.matmul %37, %40, %cst_25 {dimension_numbers = #tpu.dot_dimension_numbers<[1], [0], [0], [1], [0, 0, 1, 1], [], []>} : vector<8x32xbf16>, vector<32x32xbf16>, vector<8x32xf32> -> vector<8x32xf32>
    %42 = arith.truncf %41 : vector<8x32xf32> to vector<8x32xbf16>
    %cst_26 = arith.constant dense<0.000000e+00> : vector<8x32xf32>
    %43 = tpu.matmul %2, %42, %cst_26 {dimension_numbers = #tpu.dot_dimension_numbers<[1], [0], [0], [1], [0, 0, 1, 1], [], []>} : vector<8x8xbf16>, vector<8x32xbf16>, vector<8x32xf32> -> vector<8x32xf32>
    %c3 = arith.constant 3 : index
    %c0_27 = arith.constant 0 : index
    %44 = vector.load %arg5[%c3, %c0_27] : memref<5x32xf32, #tpu.memory_space<vmem>>, vector<1x32xf32>
    %45 = vector.broadcast %44 : vector<1x32xf32> to vector<8x32xf32>
    %46 = arith.addf %43, %45 : vector<8x32xf32>
    %47 = math.tanh %46 : vector<8x32xf32>
    %48 = arith.truncf %47 : vector<8x32xf32> to vector<8x32xbf16>
    %c3_28 = arith.constant 3 : index
    %c0_29 = arith.constant 0 : index
    %c0_30 = arith.constant 0 : index
    %49 = vector.load %arg4[%c3_28, %c0_29, %c0_30] : memref<4x32x32xf32, #tpu.memory_space<vmem>>, vector<1x32x32xf32>
    %50 = vector.shape_cast %49 : vector<1x32x32xf32> to vector<32x32xf32>
    %51 = arith.truncf %50 : vector<32x32xf32> to vector<32x32xbf16>
    %cst_31 = arith.constant dense<0.000000e+00> : vector<8x32xf32>
    %52 = tpu.matmul %48, %51, %cst_31 {dimension_numbers = #tpu.dot_dimension_numbers<[1], [0], [0], [1], [0, 0, 1, 1], [], []>} : vector<8x32xbf16>, vector<32x32xbf16>, vector<8x32xf32> -> vector<8x32xf32>
    %53 = arith.truncf %52 : vector<8x32xf32> to vector<8x32xbf16>
    %cst_32 = arith.constant dense<0.000000e+00> : vector<8x32xf32>
    %54 = tpu.matmul %2, %53, %cst_32 {dimension_numbers = #tpu.dot_dimension_numbers<[1], [0], [0], [1], [0, 0, 1, 1], [], []>} : vector<8x8xbf16>, vector<8x32xbf16>, vector<8x32xf32> -> vector<8x32xf32>
    %c4 = arith.constant 4 : index
    %c0_33 = arith.constant 0 : index
    %55 = vector.load %arg5[%c4, %c0_33] : memref<5x32xf32, #tpu.memory_space<vmem>>, vector<1x32xf32>
    %56 = vector.broadcast %55 : vector<1x32xf32> to vector<8x32xf32>
    %57 = arith.addf %54, %56 : vector<8x32xf32>
    %58 = math.tanh %57 : vector<8x32xf32>
    %c0_34 = arith.constant 0 : index
    %c0_35 = arith.constant 0 : index
    %c0_36 = arith.constant 0 : index
    %59 = vector.load %arg6[%c0_34, %c0_35, %c0_36] : memref<1x8x2xf32, #tpu.memory_space<vmem>>, vector<1x8x2xf32>
    %60 = vector.shape_cast %59 : vector<1x8x2xf32> to vector<8x2xf32>
    %61 = vector.extract_strided_slice %60 {offsets = [0, 0], sizes = [8, 1], strides = [1, 1]} : vector<8x2xf32> to vector<8x1xf32>
    %62 = vector.extract_strided_slice %60 {offsets = [0, 1], sizes = [8, 1], strides = [1, 1]} : vector<8x2xf32> to vector<8x1xf32>
    %cst_37 = arith.constant 5.000000e-01 : f32
    %63 = vector.broadcast %cst_37 : f32 to vector<8x1xf32>
    %64 = arith.cmpf ogt, %61, %63 : vector<8x1xf32>
    %cst_38 = arith.constant -1.000000e+30 : f32
    %65 = vector.shape_cast %64 : vector<8x1xi1> to vector<8x1xi1>
    %66 = vector.broadcast %65 : vector<8x1xi1> to vector<8x32xi1>
    %67 = vector.broadcast %cst_38 : f32 to vector<8x32xf32>
    %68 = arith.select %66, %58, %67 : vector<8x32xi1>, vector<8x32xf32>
    %cst_39 = arith.constant dense<0xFF800000> : vector<32xf32>
    %69 = vector.multi_reduction <maximumf>, %68, %cst_39 [0] : vector<8x32xf32> to vector<32xf32>
    %70 = vector.shape_cast %69 : vector<32xf32> to vector<1x32xf32>
    %71 = vector.broadcast %62 : vector<8x1xf32> to vector<8x32xf32>
    %72 = arith.mulf %58, %71 : vector<8x32xf32>
    %cst_40 = arith.constant dense<0.000000e+00> : vector<32xf32>
    %73 = vector.multi_reduction <add>, %72, %cst_40 [0] : vector<8x32xf32> to vector<32xf32>
    %74 = vector.shape_cast %73 : vector<32xf32> to vector<1x32xf32>
    %c0_41 = arith.constant 0 : index
    %c0_42 = arith.constant 0 : index
    %c0_43 = arith.constant 0 : index
    %75 = vector.load %arg10[%c0_41, %c0_42, %c0_43] : memref<1x1x64xf32, #tpu.memory_space<vmem>>, vector<1x1x32xf32>
    %76 = vector.shape_cast %75 : vector<1x1x32xf32> to vector<1x32xf32>
    %77 = vector.shape_cast %70 : vector<1x32xf32> to vector<1x1x32xf32>
    tpu.vector_store %arg10[%c0_41, %c0_42, %c0_43], %77 {strides = array<i32>} : memref<1x1x64xf32, #tpu.memory_space<vmem>>, vector<1x1x32xf32>,
    %c0_44 = arith.constant 0 : index
    %c0_45 = arith.constant 0 : index
    %c32 = arith.constant 32 : index
    %78 = vector.load %arg10[%c0_44, %c0_45, %c32] : memref<1x1x64xf32, #tpu.memory_space<vmem>>, vector<1x1x32xf32>
    %79 = vector.shape_cast %78 : vector<1x1x32xf32> to vector<1x32xf32>
    %80 = vector.shape_cast %74 : vector<1x32xf32> to vector<1x1x32xf32>
    tpu.vector_store %arg10[%c0_44, %c0_45, %c32], %80 {strides = array<i32>} : memref<1x1x64xf32, #tpu.memory_space<vmem>>, vector<1x1x32xf32>,
    %c0_46 = arith.constant 0 : index
    %c0_47 = arith.constant 0 : index
    %81 = vector.load %arg7[%c0_46, %c0_47] : memref<2x32xf32, #tpu.memory_space<vmem>>, vector<1x32xf32>
    %82 = arith.mulf %70, %81 : vector<1x32xf32>
    %c1_48 = arith.constant 1 : index
    %c0_49 = arith.constant 0 : index
    %83 = vector.load %arg7[%c1_48, %c0_49] : memref<2x32xf32, #tpu.memory_space<vmem>>, vector<1x32xf32>
    %84 = arith.mulf %74, %83 : vector<1x32xf32>
    %85 = arith.addf %82, %84 : vector<1x32xf32>
    %cst_50 = arith.constant dense<0.000000e+00> : vector<1xf32>
    %86 = vector.multi_reduction <add>, %85, %cst_50 [1] : vector<1x32xf32> to vector<1xf32>
    %87 = vector.shape_cast %86 : vector<1xf32> to vector<1x1xf32>
    %c0_51 = arith.constant 0 : index
    %88 = memref.load %arg8[%c0_51] : memref<1xf32, #tpu.memory_space<smem>>
    %89 = vector.broadcast %88 : f32 to vector<1x1xf32>
    %90 = arith.addf %87, %89 : vector<1x1xf32>
    %c0_52 = arith.constant 0 : index
    %c0_53 = arith.constant 0 : index
    %c0_54 = arith.constant 0 : index
    %91 = vector.load %arg9[%c0_52, %c0_53, %c0_54] : memref<1x1x1xf32, #tpu.memory_space<vmem>>, vector<1x1x1xf32>
    %92 = vector.shape_cast %91 : vector<1x1x1xf32> to vector<1x1xf32>
    %93 = vector.shape_cast %90 : vector<1x1xf32> to vector<1x1x1xf32>
    tpu.vector_store %arg9[%c0_52, %c0_53, %c0_54], %93 {strides = array<i32>} : memref<1x1x1xf32, #tpu.memory_space<vmem>>, vector<1x1x1xf32>,
    return
  }
  func.func @transform_0(%arg0: i32) -> (i32, i32, i32) {
    %c0_i32 = arith.constant 0 : i32
    %c0_i32_0 = arith.constant 0 : i32
    %c0_i32_1 = arith.constant 0 : i32
    return %arg0, %c0_i32, %c0_i32_0 : i32, i32, i32
  }
  func.func @transform_1(%arg0: i32) -> (i32, i32, i32) {
    %c0_i32 = arith.constant 0 : i32
    %c0_i32_0 = arith.constant 0 : i32
    %c0_i32_1 = arith.constant 0 : i32
    return %arg0, %c0_i32, %c0_i32_0 : i32, i32, i32
  }
  func.func @transform_2(%arg0: i32) -> (i32, i32) {
    %c0_i32 = arith.constant 0 : i32
    %c0_i32_0 = arith.constant 0 : i32
    %c0_i32_1 = arith.constant 0 : i32
    return %c0_i32, %c0_i32_0 : i32, i32
  }
  func.func @transform_3(%arg0: i32) -> (i32, i32, i32) {
    %c0_i32 = arith.constant 0 : i32
    %c0_i32_0 = arith.constant 0 : i32
    %c0_i32_1 = arith.constant 0 : i32
    %c0_i32_2 = arith.constant 0 : i32
    return %c0_i32, %c0_i32_0, %c0_i32_1 : i32, i32, i32
  }
  func.func @transform_4(%arg0: i32) -> (i32, i32) {
    %c0_i32 = arith.constant 0 : i32
    %c0_i32_0 = arith.constant 0 : i32
    %c0_i32_1 = arith.constant 0 : i32
    return %c0_i32, %c0_i32_0 : i32, i32
  }
  func.func @transform_5(%arg0: i32) -> (i32, i32, i32) {
    %c0_i32 = arith.constant 0 : i32
    %c0_i32_0 = arith.constant 0 : i32
    %c0_i32_1 = arith.constant 0 : i32
    return %arg0, %c0_i32, %c0_i32_0 : i32, i32, i32
  }
  func.func @transform_6(%arg0: i32) -> (i32, i32) {
    %c0_i32 = arith.constant 0 : i32
    %c0_i32_0 = arith.constant 0 : i32
    %c0_i32_1 = arith.constant 0 : i32
    return %c0_i32, %c0_i32_0 : i32, i32
  }
  func.func @transform_7(%arg0: i32) -> i32 {
    %c0_i32 = arith.constant 0 : i32
    %c0_i32_0 = arith.constant 0 : i32
    return %c0_i32 : i32
  }
  func.func @transform_8(%arg0: i32) -> (i32, i32, i32) {
    %c0_i32 = arith.constant 0 : i32
    %c0_i32_0 = arith.constant 0 : i32
    %c0_i32_1 = arith.constant 0 : i32
    return %arg0, %c0_i32, %c0_i32_0 : i32, i32, i32
  }
  func.func @transform_9(%arg0: i32) -> (i32, i32, i32) {
    %c0_i32 = arith.constant 0 : i32
    %c0_i32_0 = arith.constant 0 : i32
    %c0_i32_1 = arith.constant 0 : i32
    return %arg0, %c0_i32, %c0_i32_0 : i32, i32, i32
  }
}

</mosaic_0001>

<llo_original>
// kernel: tpu_custom_call.1
$region0: #{tpu_custom_call.1}
  #allocation0 [shape = 'u32[]', space=smem, size = 0x4, offset = 0x4, fixed_abs, tag = 'smem constant byte address 0x4 - core index']
  #allocation1 [shape = 'u32[144,128]{1,0:T(1,128)}', space=vmem, size = 0x12000, scoped, tag = 'internal scratch']
  #allocation2 [shape = 'f32[1]{0:T(128)S(6)}', space=smem, size = 0x200, scoped, tag = 'scoped memory for tpu_custom_call.1']
  %s0 = inlined_call_operand.vmem [shape: f32[2,8,8], index: 0, kind: input, shape index: {}]
  %s1 = inlined_call_operand.hbm [shape: f32[2,8,8], index: 1, kind: input, shape index: {}]
  %s2 = inlined_call_operand.vmem [shape: f32[8,32], index: 2, kind: input, shape index: {}]
  %s3 = inlined_call_operand.hbm [shape: f32[4,32,32], index: 3, kind: input, shape index: {}]
  %s4 = inlined_call_operand.hbm [shape: f32[5,32], index: 4, kind: input, shape index: {}]
  %s5 = inlined_call_operand.vmem [shape: f32[2,8,2], index: 5, kind: input, shape index: {}]
  %s6 = inlined_call_operand.vmem [shape: f32[2,32], index: 6, kind: input, shape index: {}]
  %s7 = inlined_call_operand.<no memory space> [shape: f32[1], index: 7, kind: input, shape index: {}]
  %s8 = inlined_call_operand.vmem [shape: f32[2,1,1], index: 8, kind: output, shape index: {0}]
  %s9 = inlined_call_operand.hbm [shape: f32[2,1,64], index: 9, kind: output, shape index: {1}]
  %10 = xla_tuple %s8, %s9
  %s11 = sld [smem:[#allocation0]]
  $region85: #{tpu_custom_call.1} parent=0
    _
  %s13 = ssub.s32 1, %s11
  %s14 = scalar_select 0, %s13, %s11
  %15 = sst [smem:[#allocation2]] %s7
  $region1: #{tpu_custom_call.1} parent=0
    #allocation3 [shape = 'u8[8192]{0}', space=vmem, size = 0x2000, scoped, tag = 'input window, operand 1']
    #allocation4 [shape = 's32[2]{0}', space=sflag, size = 0x8, scoped, tag = 'scoped memory for tpu_custom_call.1']
    #allocation5 [shape = 's32[2]{0}', space=sflag, size = 0x8, scoped, tag = 'scoped memory for tpu_custom_call.1']
    #allocation6 [shape = 'u8[65536]{0}', space=vmem, size = 0x10000, scoped, tag = 'input window, operand 3, single buffered']
    #allocation7 [shape = 's32[1]{0}', space=sflag, size = 0x4, scoped, tag = 'scoped memory for tpu_custom_call.1']
    #allocation8 [shape = 'u8[4096]{0}', space=vmem, size = 0x1000, scoped, tag = 'input window, operand 4, single buffered']
    #allocation9 [shape = 'u8[1024]{0}', space=vmem, size = 0x400, scoped, tag = 'output window, operand 1']
    %16 = vsyncpa [#allocation4], 0
    %s17 = scalar_lea.sflag [#allocation4], 1
    %18 = vsyncpa %s17, 0
    %19 = vsyncpa [#allocation7], 0
    %20 = vsyncpa [#allocation5], 0
    %s21 = scalar_lea.sflag [#allocation5], 1
    %22 = vsyncpa %s21, 0
    loop: start=0, step=1, limit=4
    $region2: #{tpu_custom_call.1} parent=1 // loop_pre_header
      _
    $region3: #{tpu_custom_call.1} parent=1 // loop_header
      %s24 = sphi 0, %s28
      %p25 = scmp.ge.s32.totalorder %s24, 4
      %s34 = sphi 0, %s36
      %s37 = sphi 0, %s34
      %s38 = sphi 0, %s37
      %s54 = sphi 0, %s38
      %s60 = sphi 0, %s62
      %s63 = sphi 0, %s60
      %s64 = sphi 0, %s63
      %s80 = sphi 0, %s64
      %s84 = sphi 0, %s84
      %s86 = sphi 0, %s84
      %s87 = sphi 0, %s86
      %s101 = sphi 0, %s87
      %s105 = sphi 0, %s105
      %s107 = sphi 0, %s105
      %s108 = sphi 0, %s107
      %s122 = sphi 0, %s108
      %s126 = sphi 0, %s126
      %s128 = sphi 0, %s126
      %s129 = sphi 0, %s128
      %s143 = sphi 0, %s129
      %s149 = sphi 0, %s151
      %s152 = sphi 0, %s149
      %s153 = sphi 0, %s152
      %s169 = sphi 0, %s153
      %s173 = sphi 0, %s173
      %s175 = sphi 0, %s173
      %s176 = sphi 0, %s175
      %s190 = sphi 0, %s176
      %s194 = sphi 0, %s194
      %s196 = sphi 0, %s194
      %s197 = sphi 0, %s196
      %s211 = sphi 0, %s197
      %s217 = sphi 0, %s219
      %s220 = sphi 0, %s217
      %s221 = sphi 0, %s220
      %s237 = sphi 0, %s221
      %s243 = sphi 0, %s245
      %s246 = sphi 0, %s243
      %s247 = sphi 0, %s246
      %s263 = sphi 0, %s247
    $region4: #{tpu_custom_call.1} parent=1 // loop_header_branch
      %27 = sbr.rel (%p25) target = $region8
    $region5: #{tpu_custom_call.1} parent=1 // loop_body
      %s29 = ssub.s32 %s24, 1
      %s30 = ssub.s32 %s24, 2
      %s31 = sadd.s32 %s24, 1
      %s32 = ssub.s32 %s24, %s31
      %p33 = scmp.eq.s32.totalorder %s32, 0
      %s35 = sadd.s32 %s34, 1
      %s36 = scalar_select %p33, %s34, %s35
      %p39 = pneg %p33
      %p40 = scmp.eq.s32.totalorder %s24, 1
      %p41 = por %p39, %p40
      %p42 = scmp.ne.s32.totalorder %s34, %s37
      %p43 = scmp.eq.s32.totalorder %s24, 0
      %p44 = por %p42, %p43
      %p45 = scmp.ne.s32.totalorder %s34, %s37
      %p46 = scmp.eq.s32.totalorder %s29, 1
      %p47 = por %p45, %p46
      %p48 = scmp.ne.s32.totalorder %s37, %s38
      %p49 = scmp.eq.s32.totalorder %s29, 0
      %p50 = por %p48, %p49
      %p51 = scmp.ne.s32.totalorder %s37, %s38
      %p52 = scmp.eq.s32.totalorder %s30, 1
      %p53 = por %p51, %p52
      %p55 = scmp.ne.s32.totalorder %s38, %s54
      %p56 = scmp.eq.s32.totalorder %s30, 0
      %p57 = por %p55, %p56
      %s58 = ssub.s32 %s24, %s31
      %p59 = scmp.eq.s32.totalorder %s58, 0
      %s61 = sadd.s32 %s60, 1
      %s62 = scalar_select %p59, %s60, %s61
      %p65 = pneg %p59
      %p66 = scmp.eq.s32.totalorder %s24, 1
      %p67 = por %p65, %p66
      %p68 = scmp.ne.s32.totalorder %s60, %s63
      %p69 = scmp.eq.s32.totalorder %s24, 0
      %p70 = por %p68, %p69
      %p71 = scmp.ne.s32.totalorder %s60, %s63
      %p72 = scmp.eq.s32.totalorder %s29, 1
      %p73 = por %p71, %p72
      %p74 = scmp.ne.s32.totalorder %s63, %s64
      %p75 = scmp.eq.s32.totalorder %s29, 0
      %p76 = por %p74, %p75
      %p77 = scmp.ne.s32.totalorder %s63, %s64
      %p78 = scmp.eq.s32.totalorder %s30, 1
      %p79 = por %p77, %p78
      %p81 = scmp.ne.s32.totalorder %s64, %s80
      %p82 = scmp.eq.s32.totalorder %s30, 0
      %p83 = por %p81, %p82
      %s85 = sadd.s32 %s84, 1
      %p88 = scmp.eq.s32.totalorder %s24, 1
      %p89 = scmp.ne.s32.totalorder %s84, %s86
      %p90 = scmp.eq.s32.totalorder %s24, 0
      %p91 = por %p89, %p90
      %p92 = scmp.ne.s32.totalorder %s84, %s86
      %p93 = scmp.eq.s32.totalorder %s29, 1
      %p94 = por %p92, %p93
      %p95 = scmp.ne.s32.totalorder %s86, %s87
      %p96 = scmp.eq.s32.totalorder %s29, 0
      %p97 = por %p95, %p96
      %p98 = scmp.ne.s32.totalorder %s86, %s87
      %p99 = scmp.eq.s32.totalorder %s30, 1
      %p100 = por %p98, %p99
      %p102 = scmp.ne.s32.totalorder %s87, %s101
      %p103 = scmp.eq.s32.totalorder %s30, 0
      %p104 = por %p102, %p103
      %s106 = sadd.s32 %s105, 1
      %p109 = scmp.eq.s32.totalorder %s24, 1
      %p110 = scmp.ne.s32.totalorder %s105, %s107
      %p111 = scmp.eq.s32.totalorder %s24, 0
      %p112 = por %p110, %p111
      %p113 = scmp.ne.s32.totalorder %s105, %s107
      %p114 = scmp.eq.s32.totalorder %s29, 1
      %p115 = por %p113, %p114
      %p116 = scmp.ne.s32.totalorder %s107, %s108
      %p117 = scmp.eq.s32.totalorder %s29, 0
      %p118 = por %p116, %p117
      %p119 = scmp.ne.s32.totalorder %s107, %s108
      %p120 = scmp.eq.s32.totalorder %s30, 1
      %p121 = por %p119, %p120
      %p123 = scmp.ne.s32.totalorder %s108, %s122
      %p124 = scmp.eq.s32.totalorder %s30, 0
      %p125 = por %p123, %p124
      %s127 = sadd.s32 %s126, 1
      %p130 = scmp.eq.s32.totalorder %s24, 1
      %p131 = scmp.ne.s32.totalorder %s126, %s128
      %p132 = scmp.eq.s32.totalorder %s24, 0
      %p133 = por %p131, %p132
      %p134 = scmp.ne.s32.totalorder %s126, %s128
      %p135 = scmp.eq.s32.totalorder %s29, 1
      %p136 = por %p134, %p135
      %p137 = scmp.ne.s32.totalorder %s128, %s129
      %p138 = scmp.eq.s32.totalorder %s29, 0
      %p139 = por %p137, %p138
      %p140 = scmp.ne.s32.totalorder %s128, %s129
      %p141 = scmp.eq.s32.totalorder %s30, 1
      %p142 = por %p140, %p141
      %p144 = scmp.ne.s32.totalorder %s129, %s143
      %p145 = scmp.eq.s32.totalorder %s30, 0
      %p146 = por %p144, %p145
      %s147 = ssub.s32 %s24, %s31
      %p148 = scmp.eq.s32.totalorder %s147, 0
      %s150 = sadd.s32 %s149, 1
      %s151 = scalar_select %p148, %s149, %s150
      %p154 = pneg %p148
      %p155 = scmp.eq.s32.totalorder %s24, 1
      %p156 = por %p154, %p155
      %p157 = scmp.ne.s32.totalorder %s149, %s152
      %p158 = scmp.eq.s32.totalorder %s24, 0
      %p159 = por %p157, %p158
      %p160 = scmp.ne.s32.totalorder %s149, %s152
      %p161 = scmp.eq.s32.totalorder %s29, 1
      %p162 = por %p160, %p161
      %p163 = scmp.ne.s32.totalorder %s152, %s153
      %p164 = scmp.eq.s32.totalorder %s29, 0
      %p165 = por %p163, %p164
      %p166 = scmp.ne.s32.totalorder %s152, %s153
      %p167 = scmp.eq.s32.totalorder %s30, 1
      %p168 = por %p166, %p167
      %p170 = scmp.ne.s32.totalorder %s153, %s169
      %p171 = scmp.eq.s32.totalorder %s30, 0
      %p172 = por %p170, %p171
      %s174 = sadd.s32 %s173, 1
      %p177 = scmp.eq.s32.totalorder %s24, 1
      %p178 = scmp.ne.s32.totalorder %s173, %s175
      %p179 = scmp.eq.s32.totalorder %s24, 0
      %p180 = por %p178, %p179
      %p181 = scmp.ne.s32.totalorder %s173, %s175
      %p182 = scmp.eq.s32.totalorder %s29, 1
      %p183 = por %p181, %p182
      %p184 = scmp.ne.s32.totalorder %s175, %s176
      %p185 = scmp.eq.s32.totalorder %s29, 0
      %p186 = por %p184, %p185
      %p187 = scmp.ne.s32.totalorder %s175, %s176
      %p188 = scmp.eq.s32.totalorder %s30, 1
      %p189 = por %p187, %p188
      %p191 = scmp.ne.s32.totalorder %s176, %s190
      %p192 = scmp.eq.s32.totalorder %s30, 0
      %p193 = por %p191, %p192
      %s195 = sadd.s32 %s194, 1
      %p198 = scmp.eq.s32.totalorder %s24, 1
      %p199 = scmp.ne.s32.totalorder %s194, %s196
      %p200 = scmp.eq.s32.totalorder %s24, 0
      %p201 = por %p199, %p200
      %p202 = scmp.ne.s32.totalorder %s194, %s196
      %p203 = scmp.eq.s32.totalorder %s29, 1
      %p204 = por %p202, %p203
      %p205 = scmp.ne.s32.totalorder %s196, %s197
      %p206 = scmp.eq.s32.totalorder %s29, 0
      %p207 = por %p205, %p206
      %p208 = scmp.ne.s32.totalorder %s196, %s197
      %p209 = scmp.eq.s32.totalorder %s30, 1
      %p210 = por %p208, %p209
      %p212 = scmp.ne.s32.totalorder %s197, %s211
      %p213 = scmp.eq.s32.totalorder %s30, 0
      %p214 = por %p212, %p213
      %s215 = ssub.s32 %s24, %s31
      %p216 = scmp.eq.s32.totalorder %s215, 0
      %s218 = sadd.s32 %s217, 1
      %s219 = scalar_select %p216, %s217, %s218
      %p222 = pneg %p216
      %p223 = scmp.eq.s32.totalorder %s24, 1
      %p224 = por %p222, %p223
      %p225 = scmp.ne.s32.totalorder %s217, %s220
      %p226 = scmp.eq.s32.totalorder %s24, 0
      %p227 = por %p225, %p226
      %p228 = scmp.ne.s32.totalorder %s217, %s220
      %p229 = scmp.eq.s32.totalorder %s29, 1
      %p230 = por %p228, %p229
      %p231 = scmp.ne.s32.totalorder %s220, %s221
      %p232 = scmp.eq.s32.totalorder %s29, 0
      %p233 = por %p231, %p232
      %p234 = scmp.ne.s32.totalorder %s220, %s221
      %p235 = scmp.eq.s32.totalorder %s30, 1
      %p236 = por %p234, %p235
      %p238 = scmp.ne.s32.totalorder %s221, %s237
      %p239 = scmp.eq.s32.totalorder %s30, 0
      %p240 = por %p238, %p239
      %s241 = ssub.s32 %s24, %s31
      %p242 = scmp.eq.s32.totalorder %s241, 0
      %s244 = sadd.s32 %s243, 1
      %s245 = scalar_select %p242, %s243, %s244
      %p248 = pneg %p242
      %p249 = scmp.eq.s32.totalorder %s24, 1
      %p250 = por %p248, %p249
      %p251 = scmp.ne.s32.totalorder %s243, %s246
      %p252 = scmp.eq.s32.totalorder %s24, 0
      %p253 = por %p251, %p252
      %p254 = scmp.ne.s32.totalorder %s243, %s246
      %p255 = scmp.eq.s32.totalorder %s29, 1
      %p256 = por %p254, %p255
      %p257 = scmp.ne.s32.totalorder %s246, %s247
      %p258 = scmp.eq.s32.totalorder %s29, 0
      %p259 = por %p257, %p258
      %p260 = scmp.ne.s32.totalorder %s246, %s247
      %p261 = scmp.eq.s32.totalorder %s30, 1
      %p262 = por %p260, %p261
      %p264 = scmp.ne.s32.totalorder %s247, %s263
      %p265 = scmp.eq.s32.totalorder %s30, 0
      %p266 = por %p264, %p265
      %p267 = scmp.le.s32.totalorder 1, %s24
      %p268 = scmp.lt.s32.totalorder %s24, 3
      %p269 = pnand %p267, %p268
      %p270 = pneg %p269
      // Predicated region
      $region9: #{tpu_custom_call.1} parent=5 // pred_check
        _
      $region10: #{tpu_custom_call.1} parent=5 // pred_check_branch
        %272 = sbr.rel (%p269) target = $region12
      $region11: #{tpu_custom_call.1} parent=5 // pred_region
        %s273 = ssub.s32 %s24, 1
        // Predicated region
        $region13: #{tpu_custom_call.1} parent=11 // pred_check
          %p274 = pneg %p97
        $region14: #{tpu_custom_call.1} parent=11 // pred_check_branch
          %276 = sbr.rel (%p274) target = $region16
        $region15: #{tpu_custom_call.1} parent=11 // pred_region
          _
        $region16: #{tpu_custom_call.1} parent=11 // pred_fallthru
          _
        // Predicated region
        $region17: #{tpu_custom_call.1} parent=11 // pred_check
          %p277 = pneg %p118
        $region18: #{tpu_custom_call.1} parent=11 // pred_check_branch
          %279 = sbr.rel (%p277) target = $region20
        $region19: #{tpu_custom_call.1} parent=11 // pred_region
          %s281 = ssub.s32 2048, 2048
          %282 = vsyncadd [#allocation7], %s281
          %s283 = sshll.u32 [#allocation6], 4
          %s284 = int_to_ptr.vmem [resolvable:$true] %s283
          %289 = dma.hbm_to_vmem [thread:$0]  %s3, 2048, %s284, [#allocation7], 128, 128, 8
        $region20: #{tpu_custom_call.1} parent=11 // pred_fallthru
          _
        // Predicated region
        $region21: #{tpu_custom_call.1} parent=11 // pred_check
          %p290 = pneg %p139
        $region22: #{tpu_custom_call.1} parent=11 // pred_check_branch
          %292 = sbr.rel (%p290) target = $region24
        $region23: #{tpu_custom_call.1} parent=11 // pred_region
          %s294 = ssub.s32 128, 128
          %295 = vsyncadd [#allocation7], %s294
          %s297 = sshll.u32 [#allocation8], 4
          %s298 = int_to_ptr.vmem [resolvable:$true] %s297
          %300 = dma.hbm_to_vmem [thread:$0]  %s4, 128, %s298, [#allocation7]
        $region24: #{tpu_custom_call.1} parent=11 // pred_fallthru
          _
        // Predicated region
        $region25: #{tpu_custom_call.1} parent=11 // pred_check
          %p301 = pneg %p186
        $region26: #{tpu_custom_call.1} parent=11 // pred_check_branch
          %303 = sbr.rel (%p301) target = $region28
        $region27: #{tpu_custom_call.1} parent=11 // pred_region
          _
        $region28: #{tpu_custom_call.1} parent=11 // pred_fallthru
          _
        // Predicated region
        $region29: #{tpu_custom_call.1} parent=11 // pred_check
          %p304 = pneg %p207
        $region30: #{tpu_custom_call.1} parent=11 // pred_check_branch
          %306 = sbr.rel (%p304) target = $region32
        $region31: #{tpu_custom_call.1} parent=11 // pred_region
          _
        $region32: #{tpu_custom_call.1} parent=11 // pred_fallthru
          _
      $region12: #{tpu_custom_call.1} parent=5 // pred_fallthru
        _
      %p307 = scmp.lt.s32.totalorder %s24, 2
      // Predicated region
      $region33: #{tpu_custom_call.1} parent=5 // pred_check
        %p308 = pneg %p307
      $region34: #{tpu_custom_call.1} parent=5 // pred_check_branch
        %310 = sbr.rel (%p308) target = $region36
      $region35: #{tpu_custom_call.1} parent=5 // pred_region
        // Predicated region
        $region37: #{tpu_custom_call.1} parent=35 // pred_check
          %p311 = pneg %p44
        $region38: #{tpu_custom_call.1} parent=35 // pred_check_branch
          %313 = sbr.rel (%p311) target = $region40
        $region39: #{tpu_custom_call.1} parent=35 // pred_region
          %p314 = scmp.lt.s32.totalorder %s24, 1
          %s315 = scalar_select %p314, %s24, 1
          %s316 = smul.addr %s315, 8
          %s317 = scalar_lea.vmem %s0, %s316
        $region40: #{tpu_custom_call.1} parent=35 // pred_fallthru
          _
        // Predicated region
        $region41: #{tpu_custom_call.1} parent=35 // pred_check
          %p318 = pneg %p70
        $region42: #{tpu_custom_call.1} parent=35 // pred_check_branch
          %320 = sbr.rel (%p318) target = $region44
        $region43: #{tpu_custom_call.1} parent=35 // pred_region
          %s321 = sand.u32 %s60, 1
          %s322 = scalar_lea.sflag [#allocation4], %s321
          %s323 = sand.u32 %s60, 1
          %s324 = smul.addr %s323, 8
          %s325 = scalar_lea.vmem [#allocation3], %s324
          %s327 = ssub.s32 128, 128
          %328 = vsyncadd %s322, %s327
          %s329 = smul.addr %s24, 128
          %s330 = scalar_lea.hbm %s1, %s329
          %s332 = sshll.u32 %s325, 4
          %s333 = int_to_ptr.vmem [resolvable:$true] %s332
          %335 = dma.hbm_to_vmem [thread:$0]  %s330, 128, %s333, %s322
        $region44: #{tpu_custom_call.1} parent=35 // pred_fallthru
          _
        // Predicated region
        $region45: #{tpu_custom_call.1} parent=35 // pred_check
          %p336 = pneg %p159
        $region46: #{tpu_custom_call.1} parent=35 // pred_check_branch
          %338 = sbr.rel (%p336) target = $region48
        $region47: #{tpu_custom_call.1} parent=35 // pred_region
          %p339 = scmp.lt.s32.totalorder %s24, 1
          %s340 = scalar_select %p339, %s24, 1
          %s341 = smul.addr %s340, 8
          %s342 = scalar_lea.vmem %s5, %s341
        $region48: #{tpu_custom_call.1} parent=35 // pred_fallthru
          _
      $region36: #{tpu_custom_call.1} parent=5 // pred_fallthru
        _
      %p343 = scmp.le.s32.totalorder 1, %s24
      %p344 = scmp.lt.s32.totalorder %s24, 3
      %p345 = pnand %p343, %p344
      %p346 = pneg %p345
      // Predicated region
      $region49: #{tpu_custom_call.1} parent=5 // pred_check
        _
      $region50: #{tpu_custom_call.1} parent=5 // pred_check_branch
        %348 = sbr.rel (%p345) target = $region52
      $region51: #{tpu_custom_call.1} parent=5 // pred_region
        %s349 = ssub.s32 %s24, 1
        %s350 = sand.u32 %s63, 1
        %s351 = scalar_lea.sflag [#allocation4], %s350
        %s352 = sand.u32 %s63, 1
        %s353 = smul.addr %s352, 8
        %s354 = scalar_lea.vmem [#allocation3], %s353
        // Predicated region
        $region53: #{tpu_custom_call.1} parent=51 // pred_check
          %p355 = pneg %p76
        $region54: #{tpu_custom_call.1} parent=51 // pred_check_branch
          %357 = sbr.rel (%p355) target = $region56
        $region55: #{tpu_custom_call.1} parent=51 // pred_region
          %358 = dma.done %s351, 128
        $region56: #{tpu_custom_call.1} parent=51 // pred_fallthru
          _
        // Predicated region
        $region57: #{tpu_custom_call.1} parent=51 // pred_check
          %p359 = pneg %p118
        $region58: #{tpu_custom_call.1} parent=51 // pred_check_branch
          %361 = sbr.rel (%p359) target = $region60
        $region59: #{tpu_custom_call.1} parent=51 // pred_region
          %362 = dma.done [#allocation7], 2048
        $region60: #{tpu_custom_call.1} parent=51 // pred_fallthru
          _
        // Predicated region
        $region61: #{tpu_custom_call.1} parent=51 // pred_check
          %p363 = pneg %p139
        $region62: #{tpu_custom_call.1} parent=51 // pred_check_branch
          %365 = sbr.rel (%p363) target = $region64
        $region63: #{tpu_custom_call.1} parent=51 // pred_region
          %366 = dma.done [#allocation7], 128
        $region64: #{tpu_custom_call.1} parent=51 // pred_fallthru
          _
        %p367 = scmp.lt.s32.totalorder %s29, 1
        %s368 = scalar_select %p367, %s29, 1
        %s369 = smul.addr %s368, 8
        %s370 = scalar_lea.vmem %s0, %s369
        %p371 = pneg %p50
        %p372 = pneg %p47
        %s373 = sand.u32 %s63, 1
        %s374 = scalar_lea.sflag [#allocation4], %s373
        %s375 = sand.u32 %s63, 1
        %s376 = smul.addr %s375, 8
        %s377 = scalar_lea.vmem [#allocation3], %s376
        %p378 = pneg %p76
        %p379 = pneg %p73
        %p380 = pneg %p97
        %p381 = pneg %p94
        %p382 = pneg %p118
        %p383 = pneg %p115
        %p384 = pneg %p139
        %p385 = pneg %p136
        %p386 = scmp.lt.s32.totalorder %s29, 1
        %s387 = scalar_select %p386, %s29, 1
        %s388 = smul.addr %s387, 8
        %s389 = scalar_lea.vmem %s5, %s388
        %p390 = pneg %p165
        %p391 = pneg %p162
        %p392 = pneg %p186
        %p393 = pneg %p183
        %p394 = pneg %p207
        %p395 = pneg %p204
        %p396 = pneg %p233
        %p397 = pneg %p230
        %p398 = scmp.lt.s32.totalorder %s29, 1
        %s399 = scalar_select %p398, %s29, 1
        %s400 = scalar_lea.vmem %s8, %s399
        %p401 = pneg %p259
        %p402 = pneg %p256
        %s403 = sand.u32 %s246, 1
        %s404 = scalar_lea.sflag [#allocation5], %s403
        %s405 = sand.u32 %s246, 1
        %s406 = scalar_lea.vmem [#allocation9], %s405
        %p407 = scmp.lt.s32.totalorder %s29, 1
        %s408 = scalar_select %p407, %s29, 1
        %s409 = smul.addr %s408, 8
        %s410 = scalar_lea.vmem %s0, %s409
        %p411 = scmp.lt.s32.totalorder %s29, 1
        %s412 = scalar_select %p411, %s29, 1
        %s413 = smul.addr %s412, 8
        %s414 = scalar_lea.vmem %s5, %s413
        %p415 = scmp.lt.s32.totalorder %s29, 1
        %s416 = scalar_select %p415, %s29, 1
        %s417 = scalar_lea.vmem %s8, %s416
        %v419 = vld [vmem:[%s410] sm:$0xff]
        %v420 = vpack.c.bf16 %v419, %v419
        %v421 = vld [vmem:[%s354] sm:$0xff]
        %v422 = vpack.c.bf16 %v421, %v421
        %v423 = vld [vmem:[%s2] sm:$0xff]
        %v424 = vpack.c.bf16 %v423, %v423
        %vm425 = vcmask 64512
        %v427 = vsel %vm425, %v422, 0
        %vm429 = vcmask 1043456
        %v431 = vsel %vm429, %v424, 0
        %433 = vmatprep.subr.bf16.mxu0 0
        %434 = vmatpush1.bf16.msra.mxu0 0
        %435 = vmatprep.subr.bf16.mxu0 0
        %436 = vmatpush1.bf16.msra.mxu0 0
        %437 = vmatprep.subr.bf16.mxu0 0
        %438 = vmatpush1.bf16.msra.mxu0 0
        %439 = vmatprep.subr.bf16.mxu0 0
        %440 = vmatpush1.bf16.msra.mxu0 0
        %441 = vmatprep.subr.bf16.mxu0 0
        %442 = vmatpush1.bf16.msra.mxu0 0
        %443 = vmatprep.subr.bf16.mxu0 0
        %444 = vmatpush1.bf16.msra.mxu0 0
        %445 = vmatprep.subr.bf16.mxu0 0
        %446 = vmatpush1.bf16.msra.mxu0 0
        %447 = vmatprep.subr.bf16.mxu0 0
        %448 = vmatpush1.bf16.msra.mxu0 %v431
        %449 = vmatprep.subr.bf16.mxu0 0
        %450 = vmatpush2.bf16.msra.mxu0 0
        %451 = vmatprep.subr.bf16.mxu0 0
        %452 = vmatpush2.bf16.msra.mxu0 0
        %453 = vmatprep.subr.bf16.mxu0 0
        %454 = vmatpush2.bf16.msra.mxu0 0
        %455 = vmatprep.subr.bf16.mxu0 0
        %456 = vmatpush2.bf16.msra.mxu0 0
        %457 = vmatprep.subr.bf16.mxu0 0
        %458 = vmatpush2.bf16.msra.mxu0 0
        %459 = vmatprep.subr.bf16.mxu0 0
        %460 = vmatpush2.bf16.msra.mxu0 0
        %461 = vmatprep.subr.bf16.mxu0 0
        %462 = vmatpush2.bf16.msra.mxu0 0
        %463 = vmatprep.subr.bf16.mxu0 0
        %464 = vmatpush2.bf16.msra.mxu0 0
        %465 = vmatprep.mubr.bf16.mxu0 0
        %466 = vmatmul.mubr.bf16.gmra.mxu0 %v427
        %v467 = vpop.f32.mrf.mxu0
        %v468 = vadd.f32 0.0, %v467
        %v469 = vpop.f32.mrf.mxu0
        %v470 = vpop.f32.mrf.mxu0
        %v471 = vpop.f32.mrf.mxu0
        %472 = vdwg.mxu0
        %v473 = vpack.c.bf16 %v468, %v468
        %v474 = vld [vmem:[#allocation8] sm:$0x1]
        %v475 = vlaneseq
        %v476 = vshrl.u32 %v475, 7
        %v477 = vsub.s32 0, %v476
        %v478 = vrot.slane %v474, %v477
        %v480 = vsel %vm425, %v420, 0
        %v483 = vsel %vm429, %v473, 0
        %485 = vmatprep.subr.bf16.mxu0 0
        %486 = vmatpush1.bf16.msra.mxu0 0
        %487 = vmatprep.subr.bf16.mxu0 0
        %488 = vmatpush1.bf16.msra.mxu0 0
        %489 = vmatprep.subr.bf16.mxu0 0
        %490 = vmatpush1.bf16.msra.mxu0 0
        %491 = vmatprep.subr.bf16.mxu0 0
        %492 = vmatpush1.bf16.msra.mxu0 0
        %493 = vmatprep.subr.bf16.mxu0 0
        %494 = vmatpush1.bf16.msra.mxu0 0
        %495 = vmatprep.subr.bf16.mxu0 0
        %496 = vmatpush1.bf16.msra.mxu0 0
        %497 = vmatprep.subr.bf16.mxu0 0
        %498 = vmatpush1.bf16.msra.mxu0 0
        %499 = vmatprep.subr.bf16.mxu0 0
        %500 = vmatpush1.bf16.msra.mxu0 %v483
        %501 = vmatprep.subr.bf16.mxu0 0
        %502 = vmatpush2.bf16.msra.mxu0 0
        %503 = vmatprep.subr.bf16.mxu0 0
        %504 = vmatpush2.bf16.msra.mxu0 0
        %505 = vmatprep.subr.bf16.mxu0 0
        %506 = vmatpush2.bf16.msra.mxu0 0
        %507 = vmatprep.subr.bf16.mxu0 0
        %508 = vmatpush2.bf16.msra.mxu0 0
        %509 = vmatprep.subr.bf16.mxu0 0
        %510 = vmatpush2.bf16.msra.mxu0 0
        %511 = vmatprep.subr.bf16.mxu0 0
        %512 = vmatpush2.bf16.msra.mxu0 0
        %513 = vmatprep.subr.bf16.mxu0 0
        %514 = vmatpush2.bf16.msra.mxu0 0
        %515 = vmatprep.subr.bf16.mxu0 0
        %516 = vmatpush2.bf16.msra.mxu0 0
        %517 = vmatprep.mubr.bf16.mxu0 0
        %518 = vmatmul.mubr.bf16.gmra.mxu0 %v480
        %v519 = vpop.f32.mrf.mxu0
        %v520 = vadd.f32 %v478, %v519
        %v521 = vpop.f32.mrf.mxu0
        %v522 = vpop.f32.mrf.mxu0
        %v523 = vpop.f32.mrf.mxu0
        %524 = vdwg.mxu0
        %v525 = vtanh.pop %v520
        %v526 = vpack.c.bf16 %v525, %v525
        %v527 = vld [vmem:[#allocation6] sm:$0xff]
        %v528 = vld [vmem:[#allocation6 + $0x8] sm:$0xff]
        %v529 = vld [vmem:[#allocation6 + $0x10] sm:$0xff]
        %v530 = vld [vmem:[#allocation6 + $0x18] sm:$0xff]
        %v531 = vpack.c.bf16 %v528, %v527
        %v532 = vpack.c.bf16 %v530, %v529
        %vm533 = vcmask 261120
        %v535 = vsel %vm533, %v526, 0
        %537 = vmatprep.subr.bf16.mxu0 0
        %538 = vmatpush1.bf16.msra.mxu0 0
        %539 = vmatprep.subr.bf16.mxu0 0
        %540 = vmatpush1.bf16.msra.mxu0 0
        %541 = vmatprep.subr.bf16.mxu0 0
        %542 = vmatpush1.bf16.msra.mxu0 0
        %543 = vmatprep.subr.bf16.mxu0 0
        %544 = vmatpush1.bf16.msra.mxu0 0
        %545 = vmatprep.subr.bf16.mxu0 0
        %546 = vmatpush1.bf16.msra.mxu0 0
        %547 = vmatprep.subr.bf16.mxu0 0
        %548 = vmatpush1.bf16.msra.mxu0 0
        %549 = vmatprep.subr.bf16.mxu0 0
        %550 = vmatpush1.bf16.msra.mxu0 %v532
        %551 = vmatprep.subr.bf16.mxu0 0
        %552 = vmatpush1.bf16.msra.mxu0 %v531
        %553 = vmatprep.subr.bf16.mxu0 0
        %554 = vmatpush2.bf16.msra.mxu0 0
        %555 = vmatprep.subr.bf16.mxu0 0
        %556 = vmatpush2.bf16.msra.mxu0 0
        %557 = vmatprep.subr.bf16.mxu0 0
        %558 = vmatpush2.bf16.msra.mxu0 0
        %559 = vmatprep.subr.bf16.mxu0 0
        %560 = vmatpush2.bf16.msra.mxu0 0
        %561 = vmatprep.subr.bf16.mxu0 0
        %562 = vmatpush2.bf16.msra.mxu0 0
        %563 = vmatprep.subr.bf16.mxu0 0
        %564 = vmatpush2.bf16.msra.mxu0 0
        %565 = vmatprep.subr.bf16.mxu0 0
        %566 = vmatpush2.bf16.msra.mxu0 0
        %567 = vmatprep.subr.bf16.mxu0 0
        %568 = vmatpush2.bf16.msra.mxu0 0
        %569 = vmatprep.mubr.bf16.mxu0 0
        %570 = vmatmul.mubr.bf16.gmra.mxu0 %v535
        %v571 = vpop.f32.mrf.mxu0
        %v572 = vadd.f32 0.0, %v571
        %v573 = vpop.f32.mrf.mxu0
        %v574 = vpop.f32.mrf.mxu0
        %v575 = vpop.f32.mrf.mxu0
        %576 = vdwg.mxu0
        %v577 = vpack.c.bf16 %v572, %v572
        %v578 = vld [vmem:[#allocation8 + $0x1] sm:$0x1]
        %v579 = vlaneseq
        %v580 = vshrl.u32 %v579, 7
        %v581 = vsub.s32 0, %v580
        %v582 = vrot.slane %v578, %v581
        %v584 = vsel %vm429, %v577, 0
        %586 = vmatprep.subr.bf16.mxu0 0
        %587 = vmatpush1.bf16.msra.mxu0 0
        %588 = vmatprep.subr.bf16.mxu0 0
        %589 = vmatpush1.bf16.msra.mxu0 0
        %590 = vmatprep.subr.bf16.mxu0 0
        %591 = vmatpush1.bf16.msra.mxu0 0
        %592 = vmatprep.subr.bf16.mxu0 0
        %593 = vmatpush1.bf16.msra.mxu0 0
        %594 = vmatprep.subr.bf16.mxu0 0
        %595 = vmatpush1.bf16.msra.mxu0 0
        %596 = vmatprep.subr.bf16.mxu0 0
        %597 = vmatpush1.bf16.msra.mxu0 0
        %598 = vmatprep.subr.bf16.mxu0 0
        %599 = vmatpush1.bf16.msra.mxu0 0
        %600 = vmatprep.subr.bf16.mxu0 0
        %601 = vmatpush1.bf16.msra.mxu0 %v584
        %602 = vmatprep.subr.bf16.mxu0 0
        %603 = vmatpush2.bf16.msra.mxu0 0
        %604 = vmatprep.subr.bf16.mxu0 0
        %605 = vmatpush2.bf16.msra.mxu0 0
        %606 = vmatprep.subr.bf16.mxu0 0
        %607 = vmatpush2.bf16.msra.mxu0 0
        %608 = vmatprep.subr.bf16.mxu0 0
        %609 = vmatpush2.bf16.msra.mxu0 0
        %610 = vmatprep.subr.bf16.mxu0 0
        %611 = vmatpush2.bf16.msra.mxu0 0
        %612 = vmatprep.subr.bf16.mxu0 0
        %613 = vmatpush2.bf16.msra.mxu0 0
        %614 = vmatprep.subr.bf16.mxu0 0
        %615 = vmatpush2.bf16.msra.mxu0 0
        %616 = vmatprep.subr.bf16.mxu0 0
        %617 = vmatpush2.bf16.msra.mxu0 0
        %618 = vmatprep.mubr.bf16.mxu0 0
        %619 = vmatmul.mubr.bf16.gmra.mxu0 %v480
        %v620 = vpop.f32.mrf.mxu0
        %v621 = vadd.f32 %v582, %v620
        %v622 = vpop.f32.mrf.mxu0
        %v623 = vpop.f32.mrf.mxu0
        %v624 = vpop.f32.mrf.mxu0
        %625 = vdwg.mxu0
        %v626 = vtanh.pop %v621
        %v627 = vpack.c.bf16 %v626, %v626
        %s628 = scalar_lea.vmem [#allocation6], 32
        %v629 = vld [vmem:[%s628] sm:$0xff]
        %v630 = vld [vmem:[%s628 + $0x8] sm:$0xff]
        %v631 = vld [vmem:[%s628 + $0x10] sm:$0xff]
        %v632 = vld [vmem:[%s628 + $0x18] sm:$0xff]
        %v633 = vpack.c.bf16 %v630, %v629
        %v634 = vpack.c.bf16 %v632, %v631
        %v636 = vsel %vm533, %v627, 0
        %638 = vmatprep.subr.bf16.mxu0 0
        %639 = vmatpush1.bf16.msra.mxu0 0
        %640 = vmatprep.subr.bf16.mxu0 0
        %641 = vmatpush1.bf16.msra.mxu0 0
        %642 = vmatprep.subr.bf16.mxu0 0
        %643 = vmatpush1.bf16.msra.mxu0 0
        %644 = vmatprep.subr.bf16.mxu0 0
        %645 = vmatpush1.bf16.msra.mxu0 0
        %646 = vmatprep.subr.bf16.mxu0 0
        %647 = vmatpush1.bf16.msra.mxu0 0
        %648 = vmatprep.subr.bf16.mxu0 0
        %649 = vmatpush1.bf16.msra.mxu0 0
        %650 = vmatprep.subr.bf16.mxu0 0
        %651 = vmatpush1.bf16.msra.mxu0 %v634
        %652 = vmatprep.subr.bf16.mxu0 0
        %653 = vmatpush1.bf16.msra.mxu0 %v633
        %654 = vmatprep.subr.bf16.mxu0 0
        %655 = vmatpush2.bf16.msra.mxu0 0
        %656 = vmatprep.subr.bf16.mxu0 0
        %657 = vmatpush2.bf16.msra.mxu0 0
        %658 = vmatprep.subr.bf16.mxu0 0
        %659 = vmatpush2.bf16.msra.mxu0 0
        %660 = vmatprep.subr.bf16.mxu0 0
        %661 = vmatpush2.bf16.msra.mxu0 0
        %662 = vmatprep.subr.bf16.mxu0 0
        %663 = vmatpush2.bf16.msra.mxu0 0
        %664 = vmatprep.subr.bf16.mxu0 0
        %665 = vmatpush2.bf16.msra.mxu0 0
        %666 = vmatprep.subr.bf16.mxu0 0
        %667 = vmatpush2.bf16.msra.mxu0 0
        %668 = vmatprep.subr.bf16.mxu0 0
        %669 = vmatpush2.bf16.msra.mxu0 0
        %670 = vmatprep.mubr.bf16.mxu0 0
        %671 = vmatmul.mubr.bf16.gmra.mxu0 %v636
        %v672 = vpop.f32.mrf.mxu0
        %v673 = vadd.f32 0.0, %v672
        %v674 = vpop.f32.mrf.mxu0
        %v675 = vpop.f32.mrf.mxu0
        %v676 = vpop.f32.mrf.mxu0
        %677 = vdwg.mxu0
        %v678 = vpack.c.bf16 %v673, %v673
        %v679 = vld [vmem:[#allocation8 + $0x2] sm:$0x1]
        %v680 = vlaneseq
        %v681 = vshrl.u32 %v680, 7
        %v682 = vsub.s32 0, %v681
        %v683 = vrot.slane %v679, %v682
        %v685 = vsel %vm429, %v678, 0
        %687 = vmatprep.subr.bf16.mxu0 0
        %688 = vmatpush1.bf16.msra.mxu0 0
        %689 = vmatprep.subr.bf16.mxu0 0
        %690 = vmatpush1.bf16.msra.mxu0 0
        %691 = vmatprep.subr.bf16.mxu0 0
        %692 = vmatpush1.bf16.msra.mxu0 0
        %693 = vmatprep.subr.bf16.mxu0 0
        %694 = vmatpush1.bf16.msra.mxu0 0
        %695 = vmatprep.subr.bf16.mxu0 0
        %696 = vmatpush1.bf16.msra.mxu0 0
        %697 = vmatprep.subr.bf16.mxu0 0
        %698 = vmatpush1.bf16.msra.mxu0 0
        %699 = vmatprep.subr.bf16.mxu0 0
        %700 = vmatpush1.bf16.msra.mxu0 0
        %701 = vmatprep.subr.bf16.mxu0 0
        %702 = vmatpush1.bf16.msra.mxu0 %v685
        %703 = vmatprep.subr.bf16.mxu0 0
        %704 = vmatpush2.bf16.msra.mxu0 0
        %705 = vmatprep.subr.bf16.mxu0 0
        %706 = vmatpush2.bf16.msra.mxu0 0
        %707 = vmatprep.subr.bf16.mxu0 0
        %708 = vmatpush2.bf16.msra.mxu0 0
        %709 = vmatprep.subr.bf16.mxu0 0
        %710 = vmatpush2.bf16.msra.mxu0 0
        %711 = vmatprep.subr.bf16.mxu0 0
        %712 = vmatpush2.bf16.msra.mxu0 0
        %713 = vmatprep.subr.bf16.mxu0 0
        %714 = vmatpush2.bf16.msra.mxu0 0
        %715 = vmatprep.subr.bf16.mxu0 0
        %716 = vmatpush2.bf16.msra.mxu0 0
        %717 = vmatprep.subr.bf16.mxu0 0
        %718 = vmatpush2.bf16.msra.mxu0 0
        %719 = vmatprep.mubr.bf16.mxu0 0
        %720 = vmatmul.mubr.bf16.gmra.mxu0 %v480
        %v721 = vpop.f32.mrf.mxu0
        %v722 = vadd.f32 %v683, %v721
        %v723 = vpop.f32.mrf.mxu0
        %v724 = vpop.f32.mrf.mxu0
        %v725 = vpop.f32.mrf.mxu0
        %726 = vdwg.mxu0
        %v727 = vtanh.pop %v722
        %v728 = vpack.c.bf16 %v727, %v727
        %s729 = scalar_lea.vmem [#allocation6], 64
        %v730 = vld [vmem:[%s729] sm:$0xff]
        %v731 = vld [vmem:[%s729 + $0x8] sm:$0xff]
        %v732 = vld [vmem:[%s729 + $0x10] sm:$0xff]
        %v733 = vld [vmem:[%s729 + $0x18] sm:$0xff]
        %v734 = vpack.c.bf16 %v731, %v730
        %v735 = vpack.c.bf16 %v733, %v732
        %v737 = vsel %vm533, %v728, 0
        %739 = vmatprep.subr.bf16.mxu0 0
        %740 = vmatpush1.bf16.msra.mxu0 0
        %741 = vmatprep.subr.bf16.mxu0 0
        %742 = vmatpush1.bf16.msra.mxu0 0
        %743 = vmatprep.subr.bf16.mxu0 0
        %744 = vmatpush1.bf16.msra.mxu0 0
        %745 = vmatprep.subr.bf16.mxu0 0
        %746 = vmatpush1.bf16.msra.mxu0 0
        %747 = vmatprep.subr.bf16.mxu0 0
        %748 = vmatpush1.bf16.msra.mxu0 0
        %749 = vmatprep.subr.bf16.mxu0 0
        %750 = vmatpush1.bf16.msra.mxu0 0
        %751 = vmatprep.subr.bf16.mxu0 0
        %752 = vmatpush1.bf16.msra.mxu0 %v735
        %753 = vmatprep.subr.bf16.mxu0 0
        %754 = vmatpush1.bf16.msra.mxu0 %v734
        %755 = vmatprep.subr.bf16.mxu0 0
        %756 = vmatpush2.bf16.msra.mxu0 0
        %757 = vmatprep.subr.bf16.mxu0 0
        %758 = vmatpush2.bf16.msra.mxu0 0
        %759 = vmatprep.subr.bf16.mxu0 0
        %760 = vmatpush2.bf16.msra.mxu0 0
        %761 = vmatprep.subr.bf16.mxu0 0
        %762 = vmatpush2.bf16.msra.mxu0 0
        %763 = vmatprep.subr.bf16.mxu0 0
        %764 = vmatpush2.bf16.msra.mxu0 0
        %765 = vmatprep.subr.bf16.mxu0 0
        %766 = vmatpush2.bf16.msra.mxu0 0
        %767 = vmatprep.subr.bf16.mxu0 0
        %768 = vmatpush2.bf16.msra.mxu0 0
        %769 = vmatprep.subr.bf16.mxu0 0
        %770 = vmatpush2.bf16.msra.mxu0 0
        %771 = vmatprep.mubr.bf16.mxu0 0
        %772 = vmatmul.mubr.bf16.gmra.mxu0 %v737
        %v773 = vpop.f32.mrf.mxu0
        %v774 = vadd.f32 0.0, %v773
        %v775 = vpop.f32.mrf.mxu0
        %v776 = vpop.f32.mrf.mxu0
        %v777 = vpop.f32.mrf.mxu0
        %778 = vdwg.mxu0
        %v779 = vpack.c.bf16 %v774, %v774
        %v780 = vld [vmem:[#allocation8 + $0x3] sm:$0x1]
        %v781 = vlaneseq
        %v782 = vshrl.u32 %v781, 7
        %v783 = vsub.s32 0, %v782
        %v784 = vrot.slane %v780, %v783
        %v786 = vsel %vm429, %v779, 0
        %788 = vmatprep.subr.bf16.mxu0 0
        %789 = vmatpush1.bf16.msra.mxu0 0
        %790 = vmatprep.subr.bf16.mxu0 0
        %791 = vmatpush1.bf16.msra.mxu0 0
        %792 = vmatprep.subr.bf16.mxu0 0
        %793 = vmatpush1.bf16.msra.mxu0 0
        %794 = vmatprep.subr.bf16.mxu0 0
        %795 = vmatpush1.bf16.msra.mxu0 0
        %796 = vmatprep.subr.bf16.mxu0 0
        %797 = vmatpush1.bf16.msra.mxu0 0
        %798 = vmatprep.subr.bf16.mxu0 0
        %799 = vmatpush1.bf16.msra.mxu0 0
        %800 = vmatprep.subr.bf16.mxu0 0
        %801 = vmatpush1.bf16.msra.mxu0 0
        %802 = vmatprep.subr.bf16.mxu0 0
        %803 = vmatpush1.bf16.msra.mxu0 %v786
        %804 = vmatprep.subr.bf16.mxu0 0
        %805 = vmatpush2.bf16.msra.mxu0 0
        %806 = vmatprep.subr.bf16.mxu0 0
        %807 = vmatpush2.bf16.msra.mxu0 0
        %808 = vmatprep.subr.bf16.mxu0 0
        %809 = vmatpush2.bf16.msra.mxu0 0
        %810 = vmatprep.subr.bf16.mxu0 0
        %811 = vmatpush2.bf16.msra.mxu0 0
        %812 = vmatprep.subr.bf16.mxu0 0
        %813 = vmatpush2.bf16.msra.mxu0 0
        %814 = vmatprep.subr.bf16.mxu0 0
        %815 = vmatpush2.bf16.msra.mxu0 0
        %816 = vmatprep.subr.bf16.mxu0 0
        %817 = vmatpush2.bf16.msra.mxu0 0
        %818 = vmatprep.subr.bf16.mxu0 0
        %819 = vmatpush2.bf16.msra.mxu0 0
        %820 = vmatprep.mubr.bf16.mxu0 0
        %821 = vmatmul.mubr.bf16.gmra.mxu0 %v480
        %v822 = vpop.f32.mrf.mxu0
        %v823 = vadd.f32 %v784, %v822
        %v824 = vpop.f32.mrf.mxu0
        %v825 = vpop.f32.mrf.mxu0
        %v826 = vpop.f32.mrf.mxu0
        %827 = vdwg.mxu0
        %v828 = vtanh.pop %v823
        %v829 = vpack.c.bf16 %v828, %v828
        %s830 = scalar_lea.vmem [#allocation6], 96
        %v831 = vld [vmem:[%s830] sm:$0xff]
        %v832 = vld [vmem:[%s830 + $0x8] sm:$0xff]
        %v833 = vld [vmem:[%s830 + $0x10] sm:$0xff]
        %v834 = vld [vmem:[%s830 + $0x18] sm:$0xff]
        %v835 = vpack.c.bf16 %v832, %v831
        %v836 = vpack.c.bf16 %v834, %v833
        %v838 = vsel %vm533, %v829, 0
        %840 = vmatprep.subr.bf16.mxu0 0
        %841 = vmatpush1.bf16.msra.mxu0 0
        %842 = vmatprep.subr.bf16.mxu0 0
        %843 = vmatpush1.bf16.msra.mxu0 0
        %844 = vmatprep.subr.bf16.mxu0 0
        %845 = vmatpush1.bf16.msra.mxu0 0
        %846 = vmatprep.subr.bf16.mxu0 0
        %847 = vmatpush1.bf16.msra.mxu0 0
        %848 = vmatprep.subr.bf16.mxu0 0
        %849 = vmatpush1.bf16.msra.mxu0 0
        %850 = vmatprep.subr.bf16.mxu0 0
        %851 = vmatpush1.bf16.msra.mxu0 0
        %852 = vmatprep.subr.bf16.mxu0 0
        %853 = vmatpush1.bf16.msra.mxu0 %v836
        %854 = vmatprep.subr.bf16.mxu0 0
        %855 = vmatpush1.bf16.msra.mxu0 %v835
        %856 = vmatprep.subr.bf16.mxu0 0
        %857 = vmatpush2.bf16.msra.mxu0 0
        %858 = vmatprep.subr.bf16.mxu0 0
        %859 = vmatpush2.bf16.msra.mxu0 0
        %860 = vmatprep.subr.bf16.mxu0 0
        %861 = vmatpush2.bf16.msra.mxu0 0
        %862 = vmatprep.subr.bf16.mxu0 0
        %863 = vmatpush2.bf16.msra.mxu0 0
        %864 = vmatprep.subr.bf16.mxu0 0
        %865 = vmatpush2.bf16.msra.mxu0 0
        %866 = vmatprep.subr.bf16.mxu0 0
        %867 = vmatpush2.bf16.msra.mxu0 0
        %868 = vmatprep.subr.bf16.mxu0 0
        %869 = vmatpush2.bf16.msra.mxu0 0
        %870 = vmatprep.subr.bf16.mxu0 0
        %871 = vmatpush2.bf16.msra.mxu0 0
        %872 = vmatprep.mubr.bf16.mxu0 0
        %873 = vmatmul.mubr.bf16.gmra.mxu0 %v838
        %v874 = vpop.f32.mrf.mxu0
        %v875 = vadd.f32 0.0, %v874
        %v876 = vpop.f32.mrf.mxu0
        %v877 = vpop.f32.mrf.mxu0
        %v878 = vpop.f32.mrf.mxu0
        %879 = vdwg.mxu0
        %v880 = vpack.c.bf16 %v875, %v875
        %v881 = vld [vmem:[#allocation8 + $0x4] sm:$0x1]
        %v882 = vlaneseq
        %v883 = vshrl.u32 %v882, 7
        %v884 = vsub.s32 0, %v883
        %v885 = vrot.slane %v881, %v884
        %v887 = vsel %vm429, %v880, 0
        %889 = vmatprep.subr.bf16.mxu0 0
        %890 = vmatpush1.bf16.msra.mxu0 0
        %891 = vmatprep.subr.bf16.mxu0 0
        %892 = vmatpush1.bf16.msra.mxu0 0
        %893 = vmatprep.subr.bf16.mxu0 0
        %894 = vmatpush1.bf16.msra.mxu0 0
        %895 = vmatprep.subr.bf16.mxu0 0
        %896 = vmatpush1.bf16.msra.mxu0 0
        %897 = vmatprep.subr.bf16.mxu0 0
        %898 = vmatpush1.bf16.msra.mxu0 0
        %899 = vmatprep.subr.bf16.mxu0 0
        %900 = vmatpush1.bf16.msra.mxu0 0
        %901 = vmatprep.subr.bf16.mxu0 0
        %902 = vmatpush1.bf16.msra.mxu0 0
        %903 = vmatprep.subr.bf16.mxu0 0
        %904 = vmatpush1.bf16.msra.mxu0 %v887
        %905 = vmatprep.subr.bf16.mxu0 0
        %906 = vmatpush2.bf16.msra.mxu0 0
        %907 = vmatprep.subr.bf16.mxu0 0
        %908 = vmatpush2.bf16.msra.mxu0 0
        %909 = vmatprep.subr.bf16.mxu0 0
        %910 = vmatpush2.bf16.msra.mxu0 0
        %911 = vmatprep.subr.bf16.mxu0 0
        %912 = vmatpush2.bf16.msra.mxu0 0
        %913 = vmatprep.subr.bf16.mxu0 0
        %914 = vmatpush2.bf16.msra.mxu0 0
        %915 = vmatprep.subr.bf16.mxu0 0
        %916 = vmatpush2.bf16.msra.mxu0 0
        %917 = vmatprep.subr.bf16.mxu0 0
        %918 = vmatpush2.bf16.msra.mxu0 0
        %919 = vmatprep.subr.bf16.mxu0 0
        %920 = vmatpush2.bf16.msra.mxu0 0
        %921 = vmatprep.mubr.bf16.mxu0 0
        %922 = vmatmul.mubr.bf16.gmra.mxu0 %v480
        %v923 = vpop.f32.mrf.mxu0
        %v924 = vadd.f32 %v885, %v923
        %v925 = vpop.f32.mrf.mxu0
        %v926 = vpop.f32.mrf.mxu0
        %v927 = vpop.f32.mrf.mxu0
        %928 = vdwg.mxu0
        %v929 = vtanh.pop %v924
        %v930 = vld [vmem:[%s414] sm:$0xff]
        %vm931 = vcmp.gt.f32.partialorder %v930, 0.5
        %v932 = vsel %vm931, 1, 0
        %933 = vset.pattern.permute.xlu0 0
        %934 = vperm.xlu0 %933, %v932
        %v935 = vpop.permute.xlu0 %934
        %vm936 = vcmp.eq.s32.totalorder %v935, 1
        %v937 = vsel %vm936, %v929, -1e+30
        %v938 = vsel %vm533, %v937, -inf
        %v939 = vrot.slane %v938, 4
        %v940 = vmax.f32 %v938, %v939
        %v941 = vrot.slane %v940, 2
        %v942 = vmax.f32 %v940, %v941
        %v943 = vrot.slane %v942, 1
        %v944 = vmax.f32 %v942, %v943
        %946 = vset.pattern.permute.xlu0 1
        %947 = vperm.xlu0 %946, %v930
        %v948 = vpop.permute.xlu0 %947
        %v950 = vmul.f32 %v929, %v948
        %v951 = vsel %vm533, %v950, 0.0
        %v952 = vrot.slane %v951, 4
        %v953 = vadd.f32 %v951, %v952
        %v954 = vrot.slane %v953, 2
        %v955 = vadd.f32 %v953, %v954
        %v956 = vrot.slane %v955, 1
        %v957 = vadd.f32 %v955, %v956
        %vm958 = vcmask 253952
        %959 = vst.msk [vmem:[%s406] sm:$0x1] %vm958, %v944
        %961 = vrot.lane.b32.xlu0 %v957, 32
        %v962 = vpop.permute.xlu0 %961
        %vm964 = vcmask 516352
        %965 = vst.msk [vmem:[%s406] sm:$0x1] %vm964, %v962
        %v966 = vld [vmem:[%s6] sm:$0x1]
        %v967 = vmul.f32 %v944, %v966
        %v968 = vld [vmem:[%s6 + $0x1] sm:$0x1]
        %v969 = vmul.f32 %v957, %v968
        %v970 = vadd.f32 %v967, %v969
        %v971 = vsel %vm958, %v970, 0.0
        %972 = vadd.xlane.f32.xlu0 %v971
        %v973 = vpop.xlane.xlu0 %972
        %s974 = sld [smem:[#allocation2]]
        %v975 = vstv %s974
        %v976 = vadd.f32 %v973, %v975
        %vm977 = vcmask 0
        %978 = vst.msk [vmem:[%s417] sm:$0x1] %vm977, %v976
        %p979 = scmp.lt.s32.totalorder %s29, 1
        %s980 = scalar_select %p979, %s29, 1
        %s981 = scalar_lea.vmem %s8, %s980
        %s982 = sand.u32 %s246, 1
        %s983 = scalar_lea.sflag [#allocation5], %s982
        %s984 = sand.u32 %s246, 1
        %s985 = scalar_lea.vmem [#allocation9], %s984
        // Predicated region
        $region65: #{tpu_custom_call.1} parent=51 // pred_check
          %p986 = pneg %p230
        $region66: #{tpu_custom_call.1} parent=51 // pred_check_branch
          %988 = sbr.rel (%p986) target = $region68
        $region67: #{tpu_custom_call.1} parent=51 // pred_region
          _
        $region68: #{tpu_custom_call.1} parent=51 // pred_fallthru
          _
        // Predicated region
        $region69: #{tpu_custom_call.1} parent=51 // pred_check
          %p989 = pneg %p256
        $region70: #{tpu_custom_call.1} parent=51 // pred_check_branch
          %991 = sbr.rel (%p989) target = $region72
        $region71: #{tpu_custom_call.1} parent=51 // pred_region
          %s993 = ssub.s32 16, 16
          %994 = vsyncadd %s983, %s993
          %s995 = smul.addr %s29, 16
          %s996 = scalar_lea.hbm %s9, %s995
          %s998 = sshll.u32 %s985, 4
          %s999 = int_to_ptr.vmem [resolvable:$true] %s998
          %1001 = dma.vmem_to_hbm [thread:$0]  %s999, 16, %s996, %s983
        $region72: #{tpu_custom_call.1} parent=51 // pred_fallthru
          _
      $region52: #{tpu_custom_call.1} parent=5 // pred_fallthru
        _
      %p1002 = scmp.le.s32.totalorder 2, %s24
      // Predicated region
      $region73: #{tpu_custom_call.1} parent=5 // pred_check
        %p1003 = pneg %p1002
      $region74: #{tpu_custom_call.1} parent=5 // pred_check_branch
        %1005 = sbr.rel (%p1003) target = $region76
      $region75: #{tpu_custom_call.1} parent=5 // pred_region
        %s1006 = ssub.s32 %s24, 2
        // Predicated region
        $region77: #{tpu_custom_call.1} parent=75 // pred_check
          %p1007 = pneg %p236
        $region78: #{tpu_custom_call.1} parent=75 // pred_check_branch
          %1009 = sbr.rel (%p1007) target = $region80
        $region79: #{tpu_custom_call.1} parent=75 // pred_region
          %p1010 = scmp.lt.s32.totalorder %s30, 1
          %s1011 = scalar_select %p1010, %s30, 1
          %s1012 = scalar_lea.vmem %s8, %s1011
        $region80: #{tpu_custom_call.1} parent=75 // pred_fallthru
          _
        // Predicated region
        $region81: #{tpu_custom_call.1} parent=75 // pred_check
          %p1013 = pneg %p262
        $region82: #{tpu_custom_call.1} parent=75 // pred_check_branch
          %1015 = sbr.rel (%p1013) target = $region84
        $region83: #{tpu_custom_call.1} parent=75 // pred_region
          %s1016 = sand.u32 %s247, 1
          %s1017 = scalar_lea.sflag [#allocation5], %s1016
          %s1018 = sand.u32 %s247, 1
          %s1019 = scalar_lea.vmem [#allocation9], %s1018
          %1020 = dma.done %s1017, 16
        $region84: #{tpu_custom_call.1} parent=75 // pred_fallthru
          _
      $region76: #{tpu_custom_call.1} parent=5 // pred_fallthru
        _
    $region6: #{tpu_custom_call.1} parent=1 // loop_footer
      %s28 = sadd.s32 1, %s24
    $region7: #{tpu_custom_call.1} parent=1 // loop_footer_branch
      %23 = sbr.rel target = $region3
    $region8: #{tpu_custom_call.1} parent=1 // loop_exit
      _
    %1021 = vsyncpa [#allocation4], 1
    %s1022 = scalar_lea.sflag [#allocation4], 1
    %1023 = vsyncpa %s1022, 1
    %1024 = vsyncpa [#allocation7], 1
    %1025 = vsyncpa [#allocation5], 1
    %s1026 = scalar_lea.sflag [#allocation5], 1
    %1027 = vsyncpa %s1026, 1

</llo_original>
